<compile_context>
chip_gen: v5e
topology: v5e:2x2
jax: 0.10.0
libtpu: 0.0.40
codegen_flags: <defaults>
</compile_context>

<pallas_src>
import jax
import jax.numpy as jnp
from jax.experimental import pallas as pl
from jax.experimental.pallas import tpu as pltpu


def sent_gru_kernel(x_ref, wpack_ref, bpack_ref, fc_ref, out_ref):
    """x_ref: (D, B, E) summed sentence embeddings (time-major).
    wpack_ref: (E + h, 3h) = [W_ih^T ; W_hh^T]   (gate order r, z, n)
    bpack_ref: (2, 3h)     = [b_ih ; b_hh]
    fc_ref:    (h + 1, 1)  = [w_fc ; b_fc]
    out_ref:   (B, 1)
    """
    D, B, E = x_ref.shape
    h = wpack_ref.shape[1] // 3

    w_ih = wpack_ref[0:E, :]          # (E, 3h)
    w_hh = wpack_ref[E:E + h, :]      # (h, 3h)
    b_ih = bpack_ref[0:1, :]          # (1, 3h)
    b_hh = bpack_ref[1:2, :]          # (1, 3h)

    def step(t, h_prev):
        x_t = x_ref[t]                                                    # (B, E)
        gi = jnp.dot(x_t, w_ih, preferred_element_type=jnp.float32) + b_ih
        gh = jnp.dot(h_prev, w_hh, preferred_element_type=jnp.float32) + b_hh
        r = jax.nn.sigmoid(gi[:, 0:h] + gh[:, 0:h])
        z = jax.nn.sigmoid(gi[:, h:2 * h] + gh[:, h:2 * h])
        n = jnp.tanh(gi[:, 2 * h:3 * h] + r * gh[:, 2 * h:3 * h])
        return (1.0 - z) * n + z * h_prev

    h0 = jnp.zeros((B, h), jnp.float32)
    h_last = jax.lax.fori_loop(0, D, step, h0, unroll=True)               # (B, h)

    w_fc = fc_ref[0:h, :]             # (h, 1)
    b_fc = fc_ref[h:h + 1, :]         # (1, 1)
    logits = jnp.dot(h_last, w_fc, preferred_element_type=jnp.float32) + b_fc
    out_ref[...] = jax.nn.sigmoid(logits)                                 # (B, 1)


def sentlstm_forward(token_ids, emb_table, params):
    """token_ids: (B, doc_len, sent_len) int32; emb_table: (V, E) f32."""
    B, D, S = token_ids.shape
    E = emb_table.shape[1]
    h = params["w_hh"].shape[0]
    assert E % 8 == 0, "emb_dim must be sublane-aligned for the packed-weight slices"

    # Glue: embedding gather + per-sentence sum, pre-reduced BEFORE the kernel
    # so the kernel never sees the (B, D, S, E) tensor.  Time-major so the
    # recurrence indexes the leading axis.
    # TODO(synk): at production vocab sizes the gather could be fused into the
    # kernel with scalar-prefetched token ids + manual DMA gather.
    xs = jnp.take(emb_table, token_ids, axis=0).sum(axis=2)       # (B, D, E)
    xs = jnp.transpose(xs, (1, 0, 2)).astype(jnp.float32)         # (D, B, E)

    # Pack parameters into 3 operands to minimize DMA count.
    w_pack = jnp.concatenate([params["w_ih"], params["w_hh"]], axis=0)    # (E+h, 3h)
    b_pack = jnp.concatenate([params["b_ih"], params["b_hh"]], axis=0)    # (2, 3h)
    fc_pack = jnp.concatenate([params["w_fc"], params["b_fc"]], axis=0)   # (h+1, 1)

    args = (xs, w_pack, b_pack, fc_pack)
    return pl.pallas_call(
        sent_gru_kernel,
        out_shape=jax.ShapeDtypeStruct((B, 1), jnp.float32),
        # everything is small: no grid, all operands fully VMEM-resident
        in_specs=[pl.BlockSpec(memory_space=pltpu.MemorySpace.VMEM)] * len(args),
        out_specs=pl.BlockSpec(memory_space=pltpu.MemorySpace.VMEM),
    )(*args)
    # TODO(synk): args.bidir=True branch (bidirectional GRU + 2h->1 fc) not implemented.


def make_params(key, emb_dim, h):
    ks = jax.random.split(key, 6)
    s = 0.1
    w_ih = s * jax.random.normal(ks[0], (emb_dim, 3 * h), jnp.float32)
    w_hh = s * jax.random.normal(ks[1], (h, 3 * h), jnp.float32)
    b_ih = s * jax.random.normal(ks[2], (1, 3 * h), jnp.float32)
    b_hh = s * jax.random.normal(ks[3], (1, 3 * h), jnp.float32)
    w_fc = s * jax.random.normal(ks[4], (h, 1), jnp.float32)
    b_fc = s * jax.random.normal(ks[5], (1, 1), jnp.float32)
    return dict(w_ih=w_ih, w_hh=w_hh, b_ih=b_ih, b_hh=b_hh, w_fc=w_fc, b_fc=b_fc)


def sentlstm_reference(token_ids, emb_table, p):
    """Pure-JAX reference mirroring the PyTorch forward (non-bidir GRU branch)."""
    B = token_ids.shape[0]
    h = p["w_hh"].shape[0]
    hp = jax.lax.Precision.HIGHEST

    xs = jnp.take(emb_table, token_ids, axis=0).sum(axis=2)      # (B, D, E)

    def step(h_prev, x_t):
        gi = jnp.dot(x_t, p["w_ih"], precision=hp) + p["b_ih"]
        gh = jnp.dot(h_prev, p["w_hh"], precision=hp) + p["b_hh"]
        r = jax.nn.sigmoid(gi[:, 0:h] + gh[:, 0:h])
        z = jax.nn.sigmoid(gi[:, h:2 * h] + gh[:, h:2 * h])
        n = jnp.tanh(gi[:, 2 * h:3 * h] + r * gh[:, 2 * h:3 * h])
        return (1.0 - z) * n + z * h_prev, None

    h0 = jnp.zeros((B, h), jnp.float32)
    h_last, _ = jax.lax.scan(step, h0, jnp.transpose(xs, (1, 0, 2)))
    return jax.nn.sigmoid(jnp.dot(h_last, p["w_fc"], precision=hp) + p["b_fc"])


if __name__ == "__main__":
    key = jax.random.PRNGKey(0)
    k_emb, k_ids, k_par = jax.random.split(key, 3)

    n_words, emb_dim = 100, 32
    h = 128                      # fixed by the module (h = 128)
    B, doc_len, sent_len = 2, 4, 8

    emb_table = jax.random.normal(k_emb, (n_words, emb_dim), jnp.float32)
    token_ids = jax.random.randint(k_ids, (B, doc_len, sent_len), 0, n_words, jnp.int32)
    params = make_params(k_par, emb_dim, h)

    out = sentlstm_forward(token_ids, emb_table, params)
    out = jax.block_until_ready(out)

    ref = sentlstm_reference(token_ids, emb_table, params)
    assert out.shape == (B, 1)
    assert jnp.allclose(out, ref, atol=5e-5, rtol=5e-5), (out, ref)

    print("KERNEL_OK")
</pallas_src>

<mosaic_0001>
module attributes {stable_mosaic.version = 11 : i64} {
  func.func @sent_gru_kernel(%arg0: memref<4x2x32xf32, #tpu.memory_space<vmem>>, %arg1: memref<160x384xf32, #tpu.memory_space<vmem>>, %arg2: memref<2x384xf32, #tpu.memory_space<vmem>>, %arg3: memref<129x1xf32, #tpu.memory_space<vmem>>, %arg4: memref<2x1xf32, #tpu.memory_space<vmem>>) attributes {dimension_semantics = [], scalar_prefetch = 0 : i64, scratch_operands = 0 : i64, tpu.core_type = #tpu.core_type<tc>} {
    %c0 = arith.constant 0 : index
    %c0_0 = arith.constant 0 : index
    %0 = vector.load %arg1[%c0, %c0_0] : memref<160x384xf32, #tpu.memory_space<vmem>>, vector<32x384xf32>
    %c32 = arith.constant 32 : index
    %c0_1 = arith.constant 0 : index
    %1 = vector.load %arg1[%c32, %c0_1] : memref<160x384xf32, #tpu.memory_space<vmem>>, vector<128x384xf32>
    %c0_2 = arith.constant 0 : index
    %c0_3 = arith.constant 0 : index
    %2 = vector.load %arg2[%c0_2, %c0_3] : memref<2x384xf32, #tpu.memory_space<vmem>>, vector<1x384xf32>
    %c1 = arith.constant 1 : index
    %c0_4 = arith.constant 0 : index
    %3 = vector.load %arg2[%c1, %c0_4] : memref<2x384xf32, #tpu.memory_space<vmem>>, vector<1x384xf32>
    %cst = arith.constant 0.000000e+00 : f32
    %4 = vector.broadcast %cst : f32 to vector<2x128xf32>
    %c0_i32 = arith.constant 0 : i32
    %5 = arith.index_cast %c0_i32 : i32 to index
    %c0_5 = arith.constant 0 : index
    %c0_6 = arith.constant 0 : index
    %6 = vector.load %arg0[%5, %c0_5, %c0_6] : memref<4x2x32xf32, #tpu.memory_space<vmem>>, vector<1x2x32xf32>
    %7 = vector.shape_cast %6 : vector<1x2x32xf32> to vector<2x32xf32>
    %cst_7 = arith.constant dense<0.000000e+00> : vector<2x384xf32>
    %8 = tpu.matmul %7, %0, %cst_7 {dimension_numbers = #tpu.dot_dimension_numbers<[1], [0], [0], [1], [0, 0, 1, 1], [], []>} : vector<2x32xf32>, vector<32x384xf32>, vector<2x384xf32> -> vector<2x384xf32>
    %9 = vector.broadcast %2 : vector<1x384xf32> to vector<2x384xf32>
    %10 = arith.addf %8, %9 : vector<2x384xf32>
    %cst_8 = arith.constant dense<0.000000e+00> : vector<2x384xf32>
    %11 = tpu.matmul %4, %1, %cst_8 {dimension_numbers = #tpu.dot_dimension_numbers<[1], [0], [0], [1], [0, 0, 1, 1], [], []>} : vector<2x128xf32>, vector<128x384xf32>, vector<2x384xf32> -> vector<2x384xf32>
    %12 = vector.broadcast %3 : vector<1x384xf32> to vector<2x384xf32>
    %13 = arith.addf %11, %12 : vector<2x384xf32>
    %14 = vector.extract_strided_slice %10 {offsets = [0, 0], sizes = [2, 128], strides = [1, 1]} : vector<2x384xf32> to vector<2x128xf32>
    %15 = vector.extract_strided_slice %13 {offsets = [0, 0], sizes = [2, 128], strides = [1, 1]} : vector<2x384xf32> to vector<2x128xf32>
    %16 = arith.addf %14, %15 : vector<2x128xf32>
    %17 = arith.negf %16 : vector<2x128xf32>
    %18 = math.exp %17 : vector<2x128xf32>
    %cst_9 = arith.constant 1.000000e+00 : f32
    %19 = vector.broadcast %cst_9 : f32 to vector<2x128xf32>
    %20 = arith.addf %19, %18 : vector<2x128xf32>
    %21 = arith.divf %19, %20 : vector<2x128xf32>
    %22 = vector.extract_strided_slice %10 {offsets = [0, 128], sizes = [2, 128], strides = [1, 1]} : vector<2x384xf32> to vector<2x128xf32>
    %23 = vector.extract_strided_slice %13 {offsets = [0, 128], sizes = [2, 128], strides = [1, 1]} : vector<2x384xf32> to vector<2x128xf32>
    %24 = arith.addf %22, %23 : vector<2x128xf32>
    %25 = arith.negf %24 : vector<2x128xf32>
    %26 = math.exp %25 : vector<2x128xf32>
    %cst_10 = arith.constant 1.000000e+00 : f32
    %27 = vector.broadcast %cst_10 : f32 to vector<2x128xf32>
    %28 = arith.addf %27, %26 : vector<2x128xf32>
    %29 = arith.divf %27, %28 : vector<2x128xf32>
    %30 = vector.extract_strided_slice %10 {offsets = [0, 256], sizes = [2, 128], strides = [1, 1]} : vector<2x384xf32> to vector<2x128xf32>
    %31 = vector.extract_strided_slice %13 {offsets = [0, 256], sizes = [2, 128], strides = [1, 1]} : vector<2x384xf32> to vector<2x128xf32>
    %32 = arith.mulf %21, %31 : vector<2x128xf32>
    %33 = arith.addf %30, %32 : vector<2x128xf32>
    %34 = math.tanh %33 : vector<2x128xf32>
    %cst_11 = arith.constant 1.000000e+00 : f32
    %35 = vector.broadcast %cst_11 : f32 to vector<2x128xf32>
    %36 = arith.subf %35, %29 : vector<2x128xf32>
    %37 = arith.mulf %36, %34 : vector<2x128xf32>
    %38 = arith.mulf %29, %4 : vector<2x128xf32>
    %39 = arith.addf %37, %38 : vector<2x128xf32>
    %c1_i32 = arith.constant 1 : i32
    %40 = arith.index_cast %c1_i32 : i32 to index
    %c0_12 = arith.constant 0 : index
    %c0_13 = arith.constant 0 : index
    %41 = vector.load %arg0[%40, %c0_12, %c0_13] : memref<4x2x32xf32, #tpu.memory_space<vmem>>, vector<1x2x32xf32>
    %42 = vector.shape_cast %41 : vector<1x2x32xf32> to vector<2x32xf32>
    %cst_14 = arith.constant dense<0.000000e+00> : vector<2x384xf32>
    %43 = tpu.matmul %42, %0, %cst_14 {dimension_numbers = #tpu.dot_dimension_numbers<[1], [0], [0], [1], [0, 0, 1, 1], [], []>} : vector<2x32xf32>, vector<32x384xf32>, vector<2x384xf32> -> vector<2x384xf32>
    %44 = vector.broadcast %2 : vector<1x384xf32> to vector<2x384xf32>
    %45 = arith.addf %43, %44 : vector<2x384xf32>
    %cst_15 = arith.constant dense<0.000000e+00> : vector<2x384xf32>
    %46 = tpu.matmul %39, %1, %cst_15 {dimension_numbers = #tpu.dot_dimension_numbers<[1], [0], [0], [1], [0, 0, 1, 1], [], []>} : vector<2x128xf32>, vector<128x384xf32>, vector<2x384xf32> -> vector<2x384xf32>
    %47 = vector.broadcast %3 : vector<1x384xf32> to vector<2x384xf32>
    %48 = arith.addf %46, %47 : vector<2x384xf32>
    %49 = vector.extract_strided_slice %45 {offsets = [0, 0], sizes = [2, 128], strides = [1, 1]} : vector<2x384xf32> to vector<2x128xf32>
    %50 = vector.extract_strided_slice %48 {offsets = [0, 0], sizes = [2, 128], strides = [1, 1]} : vector<2x384xf32> to vector<2x128xf32>
    %51 = arith.addf %49, %50 : vector<2x128xf32>
    %52 = arith.negf %51 : vector<2x128xf32>
    %53 = math.exp %52 : vector<2x128xf32>
    %cst_16 = arith.constant 1.000000e+00 : f32
    %54 = vector.broadcast %cst_16 : f32 to vector<2x128xf32>
    %55 = arith.addf %54, %53 : vector<2x128xf32>
    %56 = arith.divf %54, %55 : vector<2x128xf32>
    %57 = vector.extract_strided_slice %45 {offsets = [0, 128], sizes = [2, 128], strides = [1, 1]} : vector<2x384xf32> to vector<2x128xf32>
    %58 = vector.extract_strided_slice %48 {offsets = [0, 128], sizes = [2, 128], strides = [1, 1]} : vector<2x384xf32> to vector<2x128xf32>
    %59 = arith.addf %57, %58 : vector<2x128xf32>
    %60 = arith.negf %59 : vector<2x128xf32>
    %61 = math.exp %60 : vector<2x128xf32>
    %cst_17 = arith.constant 1.000000e+00 : f32
    %62 = vector.broadcast %cst_17 : f32 to vector<2x128xf32>
    %63 = arith.addf %62, %61 : vector<2x128xf32>
    %64 = arith.divf %62, %63 : vector<2x128xf32>
    %65 = vector.extract_strided_slice %45 {offsets = [0, 256], sizes = [2, 128], strides = [1, 1]} : vector<2x384xf32> to vector<2x128xf32>
    %66 = vector.extract_strided_slice %48 {offsets = [0, 256], sizes = [2, 128], strides = [1, 1]} : vector<2x384xf32> to vector<2x128xf32>
    %67 = arith.mulf %56, %66 : vector<2x128xf32>
    %68 = arith.addf %65, %67 : vector<2x128xf32>
    %69 = math.tanh %68 : vector<2x128xf32>
    %cst_18 = arith.constant 1.000000e+00 : f32
    %70 = vector.broadcast %cst_18 : f32 to vector<2x128xf32>
    %71 = arith.subf %70, %64 : vector<2x128xf32>
    %72 = arith.mulf %71, %69 : vector<2x128xf32>
    %73 = arith.mulf %64, %39 : vector<2x128xf32>
    %74 = arith.addf %72, %73 : vector<2x128xf32>
    %c2_i32 = arith.constant 2 : i32
    %75 = arith.index_cast %c2_i32 : i32 to index
    %c0_19 = arith.constant 0 : index
    %c0_20 = arith.constant 0 : index
    %76 = vector.load %arg0[%75, %c0_19, %c0_20] : memref<4x2x32xf32, #tpu.memory_space<vmem>>, vector<1x2x32xf32>
    %77 = vector.shape_cast %76 : vector<1x2x32xf32> to vector<2x32xf32>
    %cst_21 = arith.constant dense<0.000000e+00> : vector<2x384xf32>
    %78 = tpu.matmul %77, %0, %cst_21 {dimension_numbers = #tpu.dot_dimension_numbers<[1], [0], [0], [1], [0, 0, 1, 1], [], []>} : vector<2x32xf32>, vector<32x384xf32>, vector<2x384xf32> -> vector<2x384xf32>
    %79 = vector.broadcast %2 : vector<1x384xf32> to vector<2x384xf32>
    %80 = arith.addf %78, %79 : vector<2x384xf32>
    %cst_22 = arith.constant dense<0.000000e+00> : vector<2x384xf32>
    %81 = tpu.matmul %74, %1, %cst_22 {dimension_numbers = #tpu.dot_dimension_numbers<[1], [0], [0], [1], [0, 0, 1, 1], [], []>} : vector<2x128xf32>, vector<128x384xf32>, vector<2x384xf32> -> vector<2x384xf32>
    %82 = vector.broadcast %3 : vector<1x384xf32> to vector<2x384xf32>
    %83 = arith.addf %81, %82 : vector<2x384xf32>
    %84 = vector.extract_strided_slice %80 {offsets = [0, 0], sizes = [2, 128], strides = [1, 1]} : vector<2x384xf32> to vector<2x128xf32>
    %85 = vector.extract_strided_slice %83 {offsets = [0, 0], sizes = [2, 128], strides = [1, 1]} : vector<2x384xf32> to vector<2x128xf32>
    %86 = arith.addf %84, %85 : vector<2x128xf32>
    %87 = arith.negf %86 : vector<2x128xf32>
    %88 = math.exp %87 : vector<2x128xf32>
    %cst_23 = arith.constant 1.000000e+00 : f32
    %89 = vector.broadcast %cst_23 : f32 to vector<2x128xf32>
    %90 = arith.addf %89, %88 : vector<2x128xf32>
    %91 = arith.divf %89, %90 : vector<2x128xf32>
    %92 = vector.extract_strided_slice %80 {offsets = [0, 128], sizes = [2, 128], strides = [1, 1]} : vector<2x384xf32> to vector<2x128xf32>
    %93 = vector.extract_strided_slice %83 {offsets = [0, 128], sizes = [2, 128], strides = [1, 1]} : vector<2x384xf32> to vector<2x128xf32>
    %94 = arith.addf %92, %93 : vector<2x128xf32>
    %95 = arith.negf %94 : vector<2x128xf32>
    %96 = math.exp %95 : vector<2x128xf32>
    %cst_24 = arith.constant 1.000000e+00 : f32
    %97 = vector.broadcast %cst_24 : f32 to vector<2x128xf32>
    %98 = arith.addf %97, %96 : vector<2x128xf32>
    %99 = arith.divf %97, %98 : vector<2x128xf32>
    %100 = vector.extract_strided_slice %80 {offsets = [0, 256], sizes = [2, 128], strides = [1, 1]} : vector<2x384xf32> to vector<2x128xf32>
    %101 = vector.extract_strided_slice %83 {offsets = [0, 256], sizes = [2, 128], strides = [1, 1]} : vector<2x384xf32> to vector<2x128xf32>
    %102 = arith.mulf %91, %101 : vector<2x128xf32>
    %103 = arith.addf %100, %102 : vector<2x128xf32>
    %104 = math.tanh %103 : vector<2x128xf32>
    %cst_25 = arith.constant 1.000000e+00 : f32
    %105 = vector.broadcast %cst_25 : f32 to vector<2x128xf32>
    %106 = arith.subf %105, %99 : vector<2x128xf32>
    %107 = arith.mulf %106, %104 : vector<2x128xf32>
    %108 = arith.mulf %99, %74 : vector<2x128xf32>
    %109 = arith.addf %107, %108 : vector<2x128xf32>
    %c3_i32 = arith.constant 3 : i32
    %110 = arith.index_cast %c3_i32 : i32 to index
    %c0_26 = arith.constant 0 : index
    %c0_27 = arith.constant 0 : index
    %111 = vector.load %arg0[%110, %c0_26, %c0_27] : memref<4x2x32xf32, #tpu.memory_space<vmem>>, vector<1x2x32xf32>
    %112 = vector.shape_cast %111 : vector<1x2x32xf32> to vector<2x32xf32>
    %cst_28 = arith.constant dense<0.000000e+00> : vector<2x384xf32>
    %113 = tpu.matmul %112, %0, %cst_28 {dimension_numbers = #tpu.dot_dimension_numbers<[1], [0], [0], [1], [0, 0, 1, 1], [], []>} : vector<2x32xf32>, vector<32x384xf32>, vector<2x384xf32> -> vector<2x384xf32>
    %114 = vector.broadcast %2 : vector<1x384xf32> to vector<2x384xf32>
    %115 = arith.addf %113, %114 : vector<2x384xf32>
    %cst_29 = arith.constant dense<0.000000e+00> : vector<2x384xf32>
    %116 = tpu.matmul %109, %1, %cst_29 {dimension_numbers = #tpu.dot_dimension_numbers<[1], [0], [0], [1], [0, 0, 1, 1], [], []>} : vector<2x128xf32>, vector<128x384xf32>, vector<2x384xf32> -> vector<2x384xf32>
    %117 = vector.broadcast %3 : vector<1x384xf32> to vector<2x384xf32>
    %118 = arith.addf %116, %117 : vector<2x384xf32>
    %119 = vector.extract_strided_slice %115 {offsets = [0, 0], sizes = [2, 128], strides = [1, 1]} : vector<2x384xf32> to vector<2x128xf32>
    %120 = vector.extract_strided_slice %118 {offsets = [0, 0], sizes = [2, 128], strides = [1, 1]} : vector<2x384xf32> to vector<2x128xf32>
    %121 = arith.addf %119, %120 : vector<2x128xf32>
    %122 = arith.negf %121 : vector<2x128xf32>
    %123 = math.exp %122 : vector<2x128xf32>
    %cst_30 = arith.constant 1.000000e+00 : f32
    %124 = vector.broadcast %cst_30 : f32 to vector<2x128xf32>
    %125 = arith.addf %124, %123 : vector<2x128xf32>
    %126 = arith.divf %124, %125 : vector<2x128xf32>
    %127 = vector.extract_strided_slice %115 {offsets = [0, 128], sizes = [2, 128], strides = [1, 1]} : vector<2x384xf32> to vector<2x128xf32>
    %128 = vector.extract_strided_slice %118 {offsets = [0, 128], sizes = [2, 128], strides = [1, 1]} : vector<2x384xf32> to vector<2x128xf32>
    %129 = arith.addf %127, %128 : vector<2x128xf32>
    %130 = arith.negf %129 : vector<2x128xf32>
    %131 = math.exp %130 : vector<2x128xf32>
    %cst_31 = arith.constant 1.000000e+00 : f32
    %132 = vector.broadcast %cst_31 : f32 to vector<2x128xf32>
    %133 = arith.addf %132, %131 : vector<2x128xf32>
    %134 = arith.divf %132, %133 : vector<2x128xf32>
    %135 = vector.extract_strided_slice %115 {offsets = [0, 256], sizes = [2, 128], strides = [1, 1]} : vector<2x384xf32> to vector<2x128xf32>
    %136 = vector.extract_strided_slice %118 {offsets = [0, 256], sizes = [2, 128], strides = [1, 1]} : vector<2x384xf32> to vector<2x128xf32>
    %137 = arith.mulf %126, %136 : vector<2x128xf32>
    %138 = arith.addf %135, %137 : vector<2x128xf32>
    %139 = math.tanh %138 : vector<2x128xf32>
    %cst_32 = arith.constant 1.000000e+00 : f32
    %140 = vector.broadcast %cst_32 : f32 to vector<2x128xf32>
    %141 = arith.subf %140, %134 : vector<2x128xf32>
    %142 = arith.mulf %141, %139 : vector<2x128xf32>
    %143 = arith.mulf %134, %109 : vector<2x128xf32>
    %144 = arith.addf %142, %143 : vector<2x128xf32>
    %c4_i32 = arith.constant 4 : i32
    %c0_33 = arith.constant 0 : index
    %c0_34 = arith.constant 0 : index
    %145 = vector.load %arg3[%c0_33, %c0_34] : memref<129x1xf32, #tpu.memory_space<vmem>>, vector<128x1xf32>
    %c128 = arith.constant 128 : index
    %c0_35 = arith.constant 0 : index
    %146 = vector.load %arg3[%c128, %c0_35] : memref<129x1xf32, #tpu.memory_space<vmem>>, vector<1x1xf32>
    %cst_36 = arith.constant dense<0.000000e+00> : vector<2x1xf32>
    %147 = tpu.matmul %144, %145, %cst_36 {dimension_numbers = #tpu.dot_dimension_numbers<[1], [0], [0], [1], [0, 0, 1, 1], [], []>} : vector<2x128xf32>, vector<128x1xf32>, vector<2x1xf32> -> vector<2x1xf32>
    %148 = vector.broadcast %146 : vector<1x1xf32> to vector<2x1xf32>
    %149 = arith.addf %147, %148 : vector<2x1xf32>
    %150 = arith.negf %149 : vector<2x1xf32>
    %151 = math.exp %150 : vector<2x1xf32>
    %cst_37 = arith.constant 1.000000e+00 : f32
    %152 = vector.broadcast %cst_37 : f32 to vector<2x1xf32>
    %153 = arith.addf %152, %151 : vector<2x1xf32>
    %154 = arith.divf %152, %153 : vector<2x1xf32>
    %c0_38 = arith.constant 0 : index
    %c0_39 = arith.constant 0 : index
    %155 = vector.load %arg4[%c0_38, %c0_39] : memref<2x1xf32, #tpu.memory_space<vmem>>, vector<2x1xf32>
    tpu.vector_store %arg4[%c0_38, %c0_39], %154 {strides = array<i32>} : memref<2x1xf32, #tpu.memory_space<vmem>>, vector<2x1xf32>,
    return
  }
}

</mosaic_0001>

<llo_original>
// kernel: tpu_custom_call.1
$region0: #{tpu_custom_call.1}
  #allocation0 [shape = 'u32[]', space=smem, size = 0x4, offset = 0x4, fixed_abs, tag = 'smem constant byte address 0x4 - core index']
  #allocation1 [shape = 'u32[72,128]{1,0:T(1,128)}', space=vmem, size = 0x9000, scoped, tag = 'internal scratch']
  %s0 = inlined_call_operand.vmem [shape: f32[4,2,32], index: 0, kind: input, shape index: {}]
  %s1 = inlined_call_operand.hbm [shape: f32[160,384], index: 1, kind: input, shape index: {}]
  %s2 = inlined_call_operand.vmem [shape: f32[2,384], index: 2, kind: input, shape index: {}]
  %s3 = inlined_call_operand.vmem [shape: f32[129,1], index: 3, kind: input, shape index: {}]
  %s4 = inlined_call_operand.vmem [shape: f32[2,1], index: 4, kind: output, shape index: {}]
  %s5 = sld [smem:[#allocation0]]
  $region30: #{tpu_custom_call.1} parent=0
    _
  %s7 = ssub.s32 1, %s5
  %s8 = scalar_select 0, %s7, %s5
  $region1: #{tpu_custom_call.1} parent=0
    #allocation2 [shape = 'u8[245760]{0}', space=vmem, size = 0x3c000, scoped, tag = 'input window, operand 1, single buffered']
    #allocation3 [shape = 's32[1]{0}', space=sflag, size = 0x4, scoped, tag = 'scoped memory for tpu_custom_call.1']
    %9 = vsyncpa [#allocation3], 0
    // Predicated region
    $region2: #{tpu_custom_call.1} parent=1 // pred_check
      _
    $region3: #{tpu_custom_call.1} parent=1 // pred_check_branch
      %11 = sbr.rel (0) target = $region5
    $region4: #{tpu_custom_call.1} parent=1 // pred_region
      _
    $region5: #{tpu_custom_call.1} parent=1 // pred_fallthru
      _
    // Predicated region
    $region6: #{tpu_custom_call.1} parent=1 // pred_check
      _
    $region7: #{tpu_custom_call.1} parent=1 // pred_check_branch
      %13 = sbr.rel (0) target = $region9
    $region8: #{tpu_custom_call.1} parent=1 // pred_region
      %15 = vsyncadd [#allocation3], 0
      %s16 = sshll.u32 %s1, 4
      %s17 = int_to_ptr.hbm [resolvable:$true] %s16
      %s18 = sshll.u32 [#allocation2], 4
      %s19 = int_to_ptr.vmem [resolvable:$true] %s18
      %24 = dma.hbm_to_vmem [thread:$0]  %s17, 7680, %s19, [#allocation3], 384, 384, 24
    $region9: #{tpu_custom_call.1} parent=1 // pred_fallthru
      _
    // Predicated region
    $region10: #{tpu_custom_call.1} parent=1 // pred_check
      _
    $region11: #{tpu_custom_call.1} parent=1 // pred_check_branch
      %26 = sbr.rel (0) target = $region13
    $region12: #{tpu_custom_call.1} parent=1 // pred_region
      _
    $region13: #{tpu_custom_call.1} parent=1 // pred_fallthru
      _
    // Predicated region
    $region14: #{tpu_custom_call.1} parent=1 // pred_check
      _
    $region15: #{tpu_custom_call.1} parent=1 // pred_check_branch
      %28 = sbr.rel (0) target = $region17
    $region16: #{tpu_custom_call.1} parent=1 // pred_region
      _
    $region17: #{tpu_custom_call.1} parent=1 // pred_fallthru
      _
    // Predicated region
    $region18: #{tpu_custom_call.1} parent=1 // pred_check
      _
    $region19: #{tpu_custom_call.1} parent=1 // pred_check_branch
      %30 = sbr.rel (0) target = $region21
    $region20: #{tpu_custom_call.1} parent=1 // pred_region
      %32 = dma.done [#allocation3], 7680
    $region21: #{tpu_custom_call.1} parent=1 // pred_fallthru
      _
    %v33 = vld [vmem:[#allocation2] sm:$0xff]
    %v34 = vld [vmem:[#allocation2 + $0x8] sm:$0xff]
    %v35 = vld [vmem:[#allocation2 + $0x10] sm:$0xff]
    %v36 = vld [vmem:[#allocation2 + $0x18] sm:$0xff]
    %v37 = vld [vmem:[#allocation2 + $0x20] sm:$0xff]
    %v38 = vld [vmem:[#allocation2 + $0x28] sm:$0xff]
    %v39 = vld [vmem:[#allocation2 + $0x30] sm:$0xff]
    %v40 = vld [vmem:[#allocation2 + $0x38] sm:$0xff]
    %v41 = vld [vmem:[#allocation2 + $0x40] sm:$0xff]
    %v42 = vld [vmem:[#allocation2 + $0x48] sm:$0xff]
    %v43 = vld [vmem:[#allocation2 + $0x50] sm:$0xff]
    %v44 = vld [vmem:[#allocation2 + $0x58] sm:$0xff]
    %v45 = vld [vmem:[#allocation2 + $0x60] sm:$0xff]
    %v46 = vld [vmem:[#allocation2 + $0x68] sm:$0xff]
    %v47 = vld [vmem:[#allocation2 + $0x70] sm:$0xff]
    %v48 = vld [vmem:[#allocation2 + $0x78] sm:$0xff]
    %v49 = vld [vmem:[#allocation2 + $0x80] sm:$0xff]
    %v50 = vld [vmem:[#allocation2 + $0x88] sm:$0xff]
    %v51 = vld [vmem:[#allocation2 + $0x90] sm:$0xff]
    %v52 = vld [vmem:[#allocation2 + $0x98] sm:$0xff]
    %v53 = vld [vmem:[#allocation2 + $0xa0] sm:$0xff]
    %v54 = vld [vmem:[#allocation2 + $0xa8] sm:$0xff]
    %v55 = vld [vmem:[#allocation2 + $0xb0] sm:$0xff]
    %v56 = vld [vmem:[#allocation2 + $0xb8] sm:$0xff]
    %v57 = vld [vmem:[#allocation2 + $0xc0] sm:$0xff]
    %v58 = vld [vmem:[#allocation2 + $0xc8] sm:$0xff]
    %v59 = vld [vmem:[#allocation2 + $0xd0] sm:$0xff]
    %v60 = vld [vmem:[#allocation2 + $0xd8] sm:$0xff]
    %v61 = vld [vmem:[#allocation2 + $0xe0] sm:$0xff]
    %v62 = vld [vmem:[#allocation2 + $0xe8] sm:$0xff]
    %v63 = vld [vmem:[#allocation2 + $0xf0] sm:$0xff]
    %v64 = vld [vmem:[#allocation2 + $0xf8] sm:$0xff]
    %v65 = vld [vmem:[#allocation2 + $0x100] sm:$0xff]
    %v66 = vld [vmem:[#allocation2 + $0x108] sm:$0xff]
    %v67 = vld [vmem:[#allocation2 + $0x110] sm:$0xff]
    %v68 = vld [vmem:[#allocation2 + $0x118] sm:$0xff]
    %v69 = vld [vmem:[#allocation2 + $0x120] sm:$0xff]
    %v70 = vld [vmem:[#allocation2 + $0x128] sm:$0xff]
    %v71 = vld [vmem:[#allocation2 + $0x130] sm:$0xff]
    %v72 = vld [vmem:[#allocation2 + $0x138] sm:$0xff]
    %v73 = vld [vmem:[#allocation2 + $0x140] sm:$0xff]
    %v74 = vld [vmem:[#allocation2 + $0x148] sm:$0xff]
    %v75 = vld [vmem:[#allocation2 + $0x150] sm:$0xff]
    %v76 = vld [vmem:[#allocation2 + $0x158] sm:$0xff]
    %v77 = vld [vmem:[#allocation2 + $0x160] sm:$0xff]
    %v78 = vld [vmem:[#allocation2 + $0x168] sm:$0xff]
    %v79 = vld [vmem:[#allocation2 + $0x170] sm:$0xff]
    %v80 = vld [vmem:[#allocation2 + $0x178] sm:$0xff]
    %v81 = vld [vmem:[#allocation2 + $0x180] sm:$0xff]
    %v82 = vld [vmem:[#allocation2 + $0x188] sm:$0xff]
    %v83 = vld [vmem:[#allocation2 + $0x190] sm:$0xff]
    %v84 = vld [vmem:[#allocation2 + $0x198] sm:$0xff]
    %v85 = vld [vmem:[#allocation2 + $0x1a0] sm:$0xff]
    %v86 = vld [vmem:[#allocation2 + $0x1a8] sm:$0xff]
    %v87 = vld [vmem:[#allocation2 + $0x1b0] sm:$0xff]
    %v88 = vld [vmem:[#allocation2 + $0x1b8] sm:$0xff]
    %v89 = vld [vmem:[#allocation2 + $0x1c0] sm:$0xff]
    %v90 = vld [vmem:[#allocation2 + $0x1c8] sm:$0xff]
    %v91 = vld [vmem:[#allocation2 + $0x1d0] sm:$0xff]
    %v92 = vld [vmem:[#allocation2 + $0x1d8] sm:$0xff]
    %v93 = vld [vmem:[%s2] ss:$2 sm:$0x7]
    %s94 = scalar_lea.vmem %s2, 1
    %v95 = vld [vmem:[%s94] ss:$2 sm:$0x7]
    %v96 = vld [vmem:[%s0] sm:$0x3]
    %v98 = vperm.slane %v93, 0
    %v99 = vperm.slane %v93, 1
    %v100 = vperm.slane %v93, 2
    %vm104 = vcmask 261120
    %v106 = vsel %vm104, %v96, 0
    %108 = vmatpush.msra.mxu0 0.0
    %109 = vmatpush.msra.mxu0 0.0
    %110 = vmatpush.msra.mxu0 0.0
    %111 = vmatpush.msra.mxu0 0.0
    %112 = vmatpush.msra.mxu0 0.0
    %113 = vmatpush.msra.mxu0 0.0
    %114 = vmatpush.msra.mxu0 0.0
    %115 = vmatpush.msra.mxu0 0.0
    %116 = vmatpush.msra.mxu0 0.0
    %117 = vmatpush.msra.mxu0 0.0
    %118 = vmatpush.msra.mxu0 0.0
    %119 = vmatpush.msra.mxu0 0.0
    %120 = vmatpush.msra.mxu0 %v42
    %121 = vmatpush.msra.mxu0 %v39
    %122 = vmatpush.msra.mxu0 %v36
    %123 = vmatpush.msra.mxu0 %v33
    %124 = vmatmul.f32.gmra.mxu0 %v106
    %v125 = vpop.f32.mrf.mxu0
    %v126 = vadd.f32 %v98, %v125
    %127 = vdwg.mxu0
    %128 = vmatpush.msra.mxu0 0.0
    %129 = vmatpush.msra.mxu0 0.0
    %130 = vmatpush.msra.mxu0 0.0
    %131 = vmatpush.msra.mxu0 0.0
    %132 = vmatpush.msra.mxu0 0.0
    %133 = vmatpush.msra.mxu0 0.0
    %134 = vmatpush.msra.mxu0 0.0
    %135 = vmatpush.msra.mxu0 0.0
    %136 = vmatpush.msra.mxu0 0.0
    %137 = vmatpush.msra.mxu0 0.0
    %138 = vmatpush.msra.mxu0 0.0
    %139 = vmatpush.msra.mxu0 0.0
    %140 = vmatpush.msra.mxu0 %v43
    %141 = vmatpush.msra.mxu0 %v40
    %142 = vmatpush.msra.mxu0 %v37
    %143 = vmatpush.msra.mxu0 %v34
    %144 = vmatmul.f32.gmra.mxu0 %v106
    %v145 = vpop.f32.mrf.mxu0
    %v146 = vadd.f32 %v99, %v145
    %147 = vdwg.mxu0
    %148 = vmatpush.msra.mxu0 0.0
    %149 = vmatpush.msra.mxu0 0.0
    %150 = vmatpush.msra.mxu0 0.0
    %151 = vmatpush.msra.mxu0 0.0
    %152 = vmatpush.msra.mxu0 0.0
    %153 = vmatpush.msra.mxu0 0.0
    %154 = vmatpush.msra.mxu0 0.0
    %155 = vmatpush.msra.mxu0 0.0
    %156 = vmatpush.msra.mxu0 0.0
    %157 = vmatpush.msra.mxu0 0.0
    %158 = vmatpush.msra.mxu0 0.0
    %159 = vmatpush.msra.mxu0 0.0
    %160 = vmatpush.msra.mxu0 %v44
    %161 = vmatpush.msra.mxu0 %v41
    %162 = vmatpush.msra.mxu0 %v38
    %163 = vmatpush.msra.mxu0 %v35
    %164 = vmatmul.f32.gmra.mxu0 %v106
    %v165 = vpop.f32.mrf.mxu0
    %v166 = vadd.f32 %v100, %v165
    %167 = vdwg.mxu0
    %v169 = vperm.slane %v95, 0
    %v170 = vperm.slane %v95, 1
    %v171 = vperm.slane %v95, 2
    %175 = vmatpush.msra.mxu0 %v90
    %176 = vmatpush.msra.mxu0 %v87
    %177 = vmatpush.msra.mxu0 %v84
    %178 = vmatpush.msra.mxu0 %v81
    %179 = vmatpush.msra.mxu0 %v78
    %180 = vmatpush.msra.mxu0 %v75
    %181 = vmatpush.msra.mxu0 %v72
    %182 = vmatpush.msra.mxu0 %v69
    %183 = vmatpush.msra.mxu0 %v66
    %184 = vmatpush.msra.mxu0 %v63
    %185 = vmatpush.msra.mxu0 %v60
    %186 = vmatpush.msra.mxu0 %v57
    %187 = vmatpush.msra.mxu0 %v54
    %188 = vmatpush.msra.mxu0 %v51
    %189 = vmatpush.msra.mxu0 %v48
    %190 = vmatpush.msra.mxu0 %v45
    %191 = vmatmul.f32.gmra.mxu0 0.0
    %v192 = vpop.f32.mrf.mxu0
    %v193 = vadd.f32 %v169, %v192
    %194 = vdwg.mxu0
    %195 = vmatpush.msra.mxu0 %v91
    %196 = vmatpush.msra.mxu0 %v88
    %197 = vmatpush.msra.mxu0 %v85
    %198 = vmatpush.msra.mxu0 %v82
    %199 = vmatpush.msra.mxu0 %v79
    %200 = vmatpush.msra.mxu0 %v76
    %201 = vmatpush.msra.mxu0 %v73
    %202 = vmatpush.msra.mxu0 %v70
    %203 = vmatpush.msra.mxu0 %v67
    %204 = vmatpush.msra.mxu0 %v64
    %205 = vmatpush.msra.mxu0 %v61
    %206 = vmatpush.msra.mxu0 %v58
    %207 = vmatpush.msra.mxu0 %v55
    %208 = vmatpush.msra.mxu0 %v52
    %209 = vmatpush.msra.mxu0 %v49
    %210 = vmatpush.msra.mxu0 %v46
    %211 = vmatmul.f32.gmra.mxu0 0.0
    %v212 = vpop.f32.mrf.mxu0
    %v213 = vadd.f32 %v170, %v212
    %214 = vdwg.mxu0
    %215 = vmatpush.msra.mxu0 %v92
    %216 = vmatpush.msra.mxu0 %v89
    %217 = vmatpush.msra.mxu0 %v86
    %218 = vmatpush.msra.mxu0 %v83
    %219 = vmatpush.msra.mxu0 %v80
    %220 = vmatpush.msra.mxu0 %v77
    %221 = vmatpush.msra.mxu0 %v74
    %222 = vmatpush.msra.mxu0 %v71
    %223 = vmatpush.msra.mxu0 %v68
    %224 = vmatpush.msra.mxu0 %v65
    %225 = vmatpush.msra.mxu0 %v62
    %226 = vmatpush.msra.mxu0 %v59
    %227 = vmatpush.msra.mxu0 %v56
    %228 = vmatpush.msra.mxu0 %v53
    %229 = vmatpush.msra.mxu0 %v50
    %230 = vmatpush.msra.mxu0 %v47
    %231 = vmatmul.f32.gmra.mxu0 0.0
    %v232 = vpop.f32.mrf.mxu0
    %v233 = vadd.f32 %v171, %v232
    %234 = vdwg.mxu0
    %v235 = vadd.f32 %v126, %v193
    %v236 = vxor.u32 %v235, 2147483648
    %v237 = vmul.f32 %v236, 1.442695
    %v238 = vpow.pop %v237
    %v239 = vadd.f32 %v238, 1.0
    %v240 = vrcp.pop %v239
    %v241 = vmul.f32 %v239, %v240
    %v242 = vsub.f32 1.0, %v241
    %v243 = vmul.f32 %v240, %v242
    %v244 = vadd.f32 %v240, %v243
    %vm245 = vweird.f32 %v239
    %vm246 = vweird.f32 %v240
    %vm247 = vmor %vm245, %vm246
    %v248 = vsel %vm247, %v240, %v244
    %v249 = vand.u32 2147483647, %v239
    %vm250 = vcmp.eq.f32.partialorder %v249, 8.507059e+37
    %v251 = vand.u32 %v239, 2147483648
    %v252 = vor.u32 1.1754944e-38, %v251
    %v253 = vsel %vm250, %v252, %v248
    %v254 = vmul.f32 1.0, %v253
    %v255 = vadd.f32 %v146, %v213
    %v256 = vxor.u32 %v255, 2147483648
    %v257 = vmul.f32 %v256, 1.442695
    %v258 = vpow.pop %v257
    %v259 = vadd.f32 %v258, 1.0
    %v260 = vrcp.pop %v259
    %v261 = vmul.f32 %v259, %v260
    %v262 = vsub.f32 1.0, %v261
    %v263 = vmul.f32 %v260, %v262
    %v264 = vadd.f32 %v260, %v263
    %vm265 = vweird.f32 %v259
    %vm266 = vweird.f32 %v260
    %vm267 = vmor %vm265, %vm266
    %v268 = vsel %vm267, %v260, %v264
    %v269 = vand.u32 2147483647, %v259
    %vm270 = vcmp.eq.f32.partialorder %v269, 8.507059e+37
    %v271 = vand.u32 %v259, 2147483648
    %v272 = vor.u32 1.1754944e-38, %v271
    %v273 = vsel %vm270, %v272, %v268
    %v274 = vmul.f32 1.0, %v273
    %v275 = vmul.f32 %v254, %v233
    %v276 = vadd.f32 %v166, %v275
    %v277 = vtanh.pop %v276
    %v278 = vsub.f32 1.0, %v274
    %v279 = vmul.f32 %v278, %v277
    %v280 = vmul.f32 %v274, 0.0
    %v281 = vadd.f32 %v279, %v280
    %s282 = scalar_lea.vmem %s0, 2
    %v283 = vld [vmem:[%s282] sm:$0x3]
    %v285 = vsel %vm104, %v283, 0
    %287 = vmatpush.msra.mxu0 0.0
    %288 = vmatpush.msra.mxu0 0.0
    %289 = vmatpush.msra.mxu0 0.0
    %290 = vmatpush.msra.mxu0 0.0
    %291 = vmatpush.msra.mxu0 0.0
    %292 = vmatpush.msra.mxu0 0.0
    %293 = vmatpush.msra.mxu0 0.0
    %294 = vmatpush.msra.mxu0 0.0
    %295 = vmatpush.msra.mxu0 0.0
    %296 = vmatpush.msra.mxu0 0.0
    %297 = vmatpush.msra.mxu0 0.0
    %298 = vmatpush.msra.mxu0 0.0
    %299 = vmatpush.msra.mxu0 %v42
    %300 = vmatpush.msra.mxu0 %v39
    %301 = vmatpush.msra.mxu0 %v36
    %302 = vmatpush.msra.mxu0 %v33
    %303 = vmatmul.f32.gmra.mxu0 %v285
    %v304 = vpop.f32.mrf.mxu0
    %v305 = vadd.f32 %v98, %v304
    %306 = vdwg.mxu0
    %307 = vmatpush.msra.mxu0 0.0
    %308 = vmatpush.msra.mxu0 0.0
    %309 = vmatpush.msra.mxu0 0.0
    %310 = vmatpush.msra.mxu0 0.0
    %311 = vmatpush.msra.mxu0 0.0
    %312 = vmatpush.msra.mxu0 0.0
    %313 = vmatpush.msra.mxu0 0.0
    %314 = vmatpush.msra.mxu0 0.0
    %315 = vmatpush.msra.mxu0 0.0
    %316 = vmatpush.msra.mxu0 0.0
    %317 = vmatpush.msra.mxu0 0.0
    %318 = vmatpush.msra.mxu0 0.0
    %319 = vmatpush.msra.mxu0 %v43
    %320 = vmatpush.msra.mxu0 %v40
    %321 = vmatpush.msra.mxu0 %v37
    %322 = vmatpush.msra.mxu0 %v34
    %323 = vmatmul.f32.gmra.mxu0 %v285
    %v324 = vpop.f32.mrf.mxu0
    %v325 = vadd.f32 %v99, %v324
    %326 = vdwg.mxu0
    %327 = vmatpush.msra.mxu0 0.0
    %328 = vmatpush.msra.mxu0 0.0
    %329 = vmatpush.msra.mxu0 0.0
    %330 = vmatpush.msra.mxu0 0.0
    %331 = vmatpush.msra.mxu0 0.0
    %332 = vmatpush.msra.mxu0 0.0
    %333 = vmatpush.msra.mxu0 0.0
    %334 = vmatpush.msra.mxu0 0.0
    %335 = vmatpush.msra.mxu0 0.0
    %336 = vmatpush.msra.mxu0 0.0
    %337 = vmatpush.msra.mxu0 0.0
    %338 = vmatpush.msra.mxu0 0.0
    %339 = vmatpush.msra.mxu0 %v44
    %340 = vmatpush.msra.mxu0 %v41
    %341 = vmatpush.msra.mxu0 %v38
    %342 = vmatpush.msra.mxu0 %v35
    %343 = vmatmul.f32.gmra.mxu0 %v285
    %v344 = vpop.f32.mrf.mxu0
    %v345 = vadd.f32 %v100, %v344
    %346 = vdwg.mxu0
    %347 = vmatpush.msra.mxu0 %v90
    %348 = vmatpush.msra.mxu0 %v87
    %349 = vmatpush.msra.mxu0 %v84
    %350 = vmatpush.msra.mxu0 %v81
    %351 = vmatpush.msra.mxu0 %v78
    %352 = vmatpush.msra.mxu0 %v75
    %353 = vmatpush.msra.mxu0 %v72
    %354 = vmatpush.msra.mxu0 %v69
    %355 = vmatpush.msra.mxu0 %v66
    %356 = vmatpush.msra.mxu0 %v63
    %357 = vmatpush.msra.mxu0 %v60
    %358 = vmatpush.msra.mxu0 %v57
    %359 = vmatpush.msra.mxu0 %v54
    %360 = vmatpush.msra.mxu0 %v51
    %361 = vmatpush.msra.mxu0 %v48
    %362 = vmatpush.msra.mxu0 %v45
    %363 = vmatmul.f32.gmra.mxu0 %v281
    %v364 = vpop.f32.mrf.mxu0
    %v365 = vadd.f32 %v169, %v364
    %366 = vdwg.mxu0
    %367 = vmatpush.msra.mxu0 %v91
    %368 = vmatpush.msra.mxu0 %v88
    %369 = vmatpush.msra.mxu0 %v85
    %370 = vmatpush.msra.mxu0 %v82
    %371 = vmatpush.msra.mxu0 %v79
    %372 = vmatpush.msra.mxu0 %v76
    %373 = vmatpush.msra.mxu0 %v73
    %374 = vmatpush.msra.mxu0 %v70
    %375 = vmatpush.msra.mxu0 %v67
    %376 = vmatpush.msra.mxu0 %v64
    %377 = vmatpush.msra.mxu0 %v61
    %378 = vmatpush.msra.mxu0 %v58
    %379 = vmatpush.msra.mxu0 %v55
    %380 = vmatpush.msra.mxu0 %v52
    %381 = vmatpush.msra.mxu0 %v49
    %382 = vmatpush.msra.mxu0 %v46
    %383 = vmatmul.f32.gmra.mxu0 %v281
    %v384 = vpop.f32.mrf.mxu0
    %v385 = vadd.f32 %v170, %v384
    %386 = vdwg.mxu0
    %387 = vmatpush.msra.mxu0 %v92
    %388 = vmatpush.msra.mxu0 %v89
    %389 = vmatpush.msra.mxu0 %v86
    %390 = vmatpush.msra.mxu0 %v83
    %391 = vmatpush.msra.mxu0 %v80
    %392 = vmatpush.msra.mxu0 %v77
    %393 = vmatpush.msra.mxu0 %v74
    %394 = vmatpush.msra.mxu0 %v71
    %395 = vmatpush.msra.mxu0 %v68
    %396 = vmatpush.msra.mxu0 %v65
    %397 = vmatpush.msra.mxu0 %v62
    %398 = vmatpush.msra.mxu0 %v59
    %399 = vmatpush.msra.mxu0 %v56
    %400 = vmatpush.msra.mxu0 %v53
    %401 = vmatpush.msra.mxu0 %v50
    %402 = vmatpush.msra.mxu0 %v47
    %403 = vmatmul.f32.gmra.mxu0 %v281
    %v404 = vpop.f32.mrf.mxu0
    %v405 = vadd.f32 %v171, %v404
    %406 = vdwg.mxu0
    %v407 = vadd.f32 %v305, %v365
    %v408 = vxor.u32 %v407, 2147483648
    %v409 = vmul.f32 %v408, 1.442695
    %v410 = vpow.pop %v409
    %v411 = vadd.f32 %v410, 1.0
    %v412 = vrcp.pop %v411
    %v413 = vmul.f32 %v411, %v412
    %v414 = vsub.f32 1.0, %v413
    %v415 = vmul.f32 %v412, %v414
    %v416 = vadd.f32 %v412, %v415
    %vm417 = vweird.f32 %v411
    %vm418 = vweird.f32 %v412
    %vm419 = vmor %vm417, %vm418
    %v420 = vsel %vm419, %v412, %v416
    %v421 = vand.u32 2147483647, %v411
    %vm422 = vcmp.eq.f32.partialorder %v421, 8.507059e+37
    %v423 = vand.u32 %v411, 2147483648
    %v424 = vor.u32 1.1754944e-38, %v423
    %v425 = vsel %vm422, %v424, %v420
    %v426 = vmul.f32 1.0, %v425
    %v427 = vadd.f32 %v325, %v385
    %v428 = vxor.u32 %v427, 2147483648
    %v429 = vmul.f32 %v428, 1.442695
    %v430 = vpow.pop %v429
    %v431 = vadd.f32 %v430, 1.0
    %v432 = vrcp.pop %v431
    %v433 = vmul.f32 %v431, %v432
    %v434 = vsub.f32 1.0, %v433
    %v435 = vmul.f32 %v432, %v434
    %v436 = vadd.f32 %v432, %v435
    %vm437 = vweird.f32 %v431
    %vm438 = vweird.f32 %v432
    %vm439 = vmor %vm437, %vm438
    %v440 = vsel %vm439, %v432, %v436
    %v441 = vand.u32 2147483647, %v431
    %vm442 = vcmp.eq.f32.partialorder %v441, 8.507059e+37
    %v443 = vand.u32 %v431, 2147483648
    %v444 = vor.u32 1.1754944e-38, %v443
    %v445 = vsel %vm442, %v444, %v440
    %v446 = vmul.f32 1.0, %v445
    %v447 = vmul.f32 %v426, %v405
    %v448 = vadd.f32 %v345, %v447
    %v449 = vtanh.pop %v448
    %v450 = vsub.f32 1.0, %v446
    %v451 = vmul.f32 %v450, %v449
    %v452 = vmul.f32 %v446, %v281
    %v453 = vadd.f32 %v451, %v452
    %s454 = scalar_lea.vmem %s0, 4
    %v455 = vld [vmem:[%s454] sm:$0x3]
    %v457 = vsel %vm104, %v455, 0
    %459 = vmatpush.msra.mxu0 0.0
    %460 = vmatpush.msra.mxu0 0.0
    %461 = vmatpush.msra.mxu0 0.0
    %462 = vmatpush.msra.mxu0 0.0
    %463 = vmatpush.msra.mxu0 0.0
    %464 = vmatpush.msra.mxu0 0.0
    %465 = vmatpush.msra.mxu0 0.0
    %466 = vmatpush.msra.mxu0 0.0
    %467 = vmatpush.msra.mxu0 0.0
    %468 = vmatpush.msra.mxu0 0.0
    %469 = vmatpush.msra.mxu0 0.0
    %470 = vmatpush.msra.mxu0 0.0
    %471 = vmatpush.msra.mxu0 %v42
    %472 = vmatpush.msra.mxu0 %v39
    %473 = vmatpush.msra.mxu0 %v36
    %474 = vmatpush.msra.mxu0 %v33
    %475 = vmatmul.f32.gmra.mxu0 %v457
    %v476 = vpop.f32.mrf.mxu0
    %v477 = vadd.f32 %v98, %v476
    %478 = vdwg.mxu0
    %479 = vmatpush.msra.mxu0 0.0
    %480 = vmatpush.msra.mxu0 0.0
    %481 = vmatpush.msra.mxu0 0.0
    %482 = vmatpush.msra.mxu0 0.0
    %483 = vmatpush.msra.mxu0 0.0
    %484 = vmatpush.msra.mxu0 0.0
    %485 = vmatpush.msra.mxu0 0.0
    %486 = vmatpush.msra.mxu0 0.0
    %487 = vmatpush.msra.mxu0 0.0
    %488 = vmatpush.msra.mxu0 0.0
    %489 = vmatpush.msra.mxu0 0.0
    %490 = vmatpush.msra.mxu0 0.0
    %491 = vmatpush.msra.mxu0 %v43
    %492 = vmatpush.msra.mxu0 %v40
    %493 = vmatpush.msra.mxu0 %v37
    %494 = vmatpush.msra.mxu0 %v34
    %495 = vmatmul.f32.gmra.mxu0 %v457
    %v496 = vpop.f32.mrf.mxu0
    %v497 = vadd.f32 %v99, %v496
    %498 = vdwg.mxu0
    %499 = vmatpush.msra.mxu0 0.0
    %500 = vmatpush.msra.mxu0 0.0
    %501 = vmatpush.msra.mxu0 0.0
    %502 = vmatpush.msra.mxu0 0.0
    %503 = vmatpush.msra.mxu0 0.0
    %504 = vmatpush.msra.mxu0 0.0
    %505 = vmatpush.msra.mxu0 0.0
    %506 = vmatpush.msra.mxu0 0.0
    %507 = vmatpush.msra.mxu0 0.0
    %508 = vmatpush.msra.mxu0 0.0
    %509 = vmatpush.msra.mxu0 0.0
    %510 = vmatpush.msra.mxu0 0.0
    %511 = vmatpush.msra.mxu0 %v44
    %512 = vmatpush.msra.mxu0 %v41
    %513 = vmatpush.msra.mxu0 %v38
    %514 = vmatpush.msra.mxu0 %v35
    %515 = vmatmul.f32.gmra.mxu0 %v457
    %v516 = vpop.f32.mrf.mxu0
    %v517 = vadd.f32 %v100, %v516
    %518 = vdwg.mxu0
    %519 = vmatpush.msra.mxu0 %v90
    %520 = vmatpush.msra.mxu0 %v87
    %521 = vmatpush.msra.mxu0 %v84
    %522 = vmatpush.msra.mxu0 %v81
    %523 = vmatpush.msra.mxu0 %v78
    %524 = vmatpush.msra.mxu0 %v75
    %525 = vmatpush.msra.mxu0 %v72
    %526 = vmatpush.msra.mxu0 %v69
    %527 = vmatpush.msra.mxu0 %v66
    %528 = vmatpush.msra.mxu0 %v63
    %529 = vmatpush.msra.mxu0 %v60
    %530 = vmatpush.msra.mxu0 %v57
    %531 = vmatpush.msra.mxu0 %v54
    %532 = vmatpush.msra.mxu0 %v51
    %533 = vmatpush.msra.mxu0 %v48
    %534 = vmatpush.msra.mxu0 %v45
    %535 = vmatmul.f32.gmra.mxu0 %v453
    %v536 = vpop.f32.mrf.mxu0
    %v537 = vadd.f32 %v169, %v536
    %538 = vdwg.mxu0
    %539 = vmatpush.msra.mxu0 %v91
    %540 = vmatpush.msra.mxu0 %v88
    %541 = vmatpush.msra.mxu0 %v85
    %542 = vmatpush.msra.mxu0 %v82
    %543 = vmatpush.msra.mxu0 %v79
    %544 = vmatpush.msra.mxu0 %v76
    %545 = vmatpush.msra.mxu0 %v73
    %546 = vmatpush.msra.mxu0 %v70
    %547 = vmatpush.msra.mxu0 %v67
    %548 = vmatpush.msra.mxu0 %v64
    %549 = vmatpush.msra.mxu0 %v61
    %550 = vmatpush.msra.mxu0 %v58
    %551 = vmatpush.msra.mxu0 %v55
    %552 = vmatpush.msra.mxu0 %v52
    %553 = vmatpush.msra.mxu0 %v49
    %554 = vmatpush.msra.mxu0 %v46
    %555 = vmatmul.f32.gmra.mxu0 %v453
    %v556 = vpop.f32.mrf.mxu0
    %v557 = vadd.f32 %v170, %v556
    %558 = vdwg.mxu0
    %559 = vmatpush.msra.mxu0 %v92
    %560 = vmatpush.msra.mxu0 %v89
    %561 = vmatpush.msra.mxu0 %v86
    %562 = vmatpush.msra.mxu0 %v83
    %563 = vmatpush.msra.mxu0 %v80
    %564 = vmatpush.msra.mxu0 %v77
    %565 = vmatpush.msra.mxu0 %v74
    %566 = vmatpush.msra.mxu0 %v71
    %567 = vmatpush.msra.mxu0 %v68
    %568 = vmatpush.msra.mxu0 %v65
    %569 = vmatpush.msra.mxu0 %v62
    %570 = vmatpush.msra.mxu0 %v59
    %571 = vmatpush.msra.mxu0 %v56
    %572 = vmatpush.msra.mxu0 %v53
    %573 = vmatpush.msra.mxu0 %v50
    %574 = vmatpush.msra.mxu0 %v47
    %575 = vmatmul.f32.gmra.mxu0 %v453
    %v576 = vpop.f32.mrf.mxu0
    %v577 = vadd.f32 %v171, %v576
    %578 = vdwg.mxu0
    %v579 = vadd.f32 %v477, %v537
    %v580 = vxor.u32 %v579, 2147483648
    %v581 = vmul.f32 %v580, 1.442695
    %v582 = vpow.pop %v581
    %v583 = vadd.f32 %v582, 1.0
    %v584 = vrcp.pop %v583
    %v585 = vmul.f32 %v583, %v584
    %v586 = vsub.f32 1.0, %v585
    %v587 = vmul.f32 %v584, %v586
    %v588 = vadd.f32 %v584, %v587
    %vm589 = vweird.f32 %v583
    %vm590 = vweird.f32 %v584
    %vm591 = vmor %vm589, %vm590
    %v592 = vsel %vm591, %v584, %v588
    %v593 = vand.u32 2147483647, %v583
    %vm594 = vcmp.eq.f32.partialorder %v593, 8.507059e+37
    %v595 = vand.u32 %v583, 2147483648
    %v596 = vor.u32 1.1754944e-38, %v595
    %v597 = vsel %vm594, %v596, %v592
    %v598 = vmul.f32 1.0, %v597
    %v599 = vadd.f32 %v497, %v557
    %v600 = vxor.u32 %v599, 2147483648
    %v601 = vmul.f32 %v600, 1.442695
    %v602 = vpow.pop %v601
    %v603 = vadd.f32 %v602, 1.0
    %v604 = vrcp.pop %v603
    %v605 = vmul.f32 %v603, %v604
    %v606 = vsub.f32 1.0, %v605
    %v607 = vmul.f32 %v604, %v606
    %v608 = vadd.f32 %v604, %v607
    %vm609 = vweird.f32 %v603
    %vm610 = vweird.f32 %v604
    %vm611 = vmor %vm609, %vm610
    %v612 = vsel %vm611, %v604, %v608
    %v613 = vand.u32 2147483647, %v603
    %vm614 = vcmp.eq.f32.partialorder %v613, 8.507059e+37
    %v615 = vand.u32 %v603, 2147483648
    %v616 = vor.u32 1.1754944e-38, %v615
    %v617 = vsel %vm614, %v616, %v612
    %v618 = vmul.f32 1.0, %v617
    %v619 = vmul.f32 %v598, %v577
    %v620 = vadd.f32 %v517, %v619
    %v621 = vtanh.pop %v620
    %v622 = vsub.f32 1.0, %v618
    %v623 = vmul.f32 %v622, %v621
    %v624 = vmul.f32 %v618, %v453
    %v625 = vadd.f32 %v623, %v624
    %s626 = scalar_lea.vmem %s0, 6
    %v627 = vld [vmem:[%s626] sm:$0x3]
    %v629 = vsel %vm104, %v627, 0
    %631 = vmatpush.msra.mxu0 0.0
    %632 = vmatpush.msra.mxu0 0.0
    %633 = vmatpush.msra.mxu0 0.0
    %634 = vmatpush.msra.mxu0 0.0
    %635 = vmatpush.msra.mxu0 0.0
    %636 = vmatpush.msra.mxu0 0.0
    %637 = vmatpush.msra.mxu0 0.0
    %638 = vmatpush.msra.mxu0 0.0
    %639 = vmatpush.msra.mxu0 0.0
    %640 = vmatpush.msra.mxu0 0.0
    %641 = vmatpush.msra.mxu0 0.0
    %642 = vmatpush.msra.mxu0 0.0
    %643 = vmatpush.msra.mxu0 %v42
    %644 = vmatpush.msra.mxu0 %v39
    %645 = vmatpush.msra.mxu0 %v36
    %646 = vmatpush.msra.mxu0 %v33
    %647 = vmatmul.f32.gmra.mxu0 %v629
    %v648 = vpop.f32.mrf.mxu0
    %v649 = vadd.f32 %v98, %v648
    %650 = vdwg.mxu0
    %651 = vmatpush.msra.mxu0 0.0
    %652 = vmatpush.msra.mxu0 0.0
    %653 = vmatpush.msra.mxu0 0.0
    %654 = vmatpush.msra.mxu0 0.0
    %655 = vmatpush.msra.mxu0 0.0
    %656 = vmatpush.msra.mxu0 0.0
    %657 = vmatpush.msra.mxu0 0.0
    %658 = vmatpush.msra.mxu0 0.0
    %659 = vmatpush.msra.mxu0 0.0
    %660 = vmatpush.msra.mxu0 0.0
    %661 = vmatpush.msra.mxu0 0.0
    %662 = vmatpush.msra.mxu0 0.0
    %663 = vmatpush.msra.mxu0 %v43
    %664 = vmatpush.msra.mxu0 %v40
    %665 = vmatpush.msra.mxu0 %v37
    %666 = vmatpush.msra.mxu0 %v34
    %667 = vmatmul.f32.gmra.mxu0 %v629
    %v668 = vpop.f32.mrf.mxu0
    %v669 = vadd.f32 %v99, %v668
    %670 = vdwg.mxu0
    %671 = vmatpush.msra.mxu0 0.0
    %672 = vmatpush.msra.mxu0 0.0
    %673 = vmatpush.msra.mxu0 0.0
    %674 = vmatpush.msra.mxu0 0.0
    %675 = vmatpush.msra.mxu0 0.0
    %676 = vmatpush.msra.mxu0 0.0
    %677 = vmatpush.msra.mxu0 0.0
    %678 = vmatpush.msra.mxu0 0.0
    %679 = vmatpush.msra.mxu0 0.0
    %680 = vmatpush.msra.mxu0 0.0
    %681 = vmatpush.msra.mxu0 0.0
    %682 = vmatpush.msra.mxu0 0.0
    %683 = vmatpush.msra.mxu0 %v44
    %684 = vmatpush.msra.mxu0 %v41
    %685 = vmatpush.msra.mxu0 %v38
    %686 = vmatpush.msra.mxu0 %v35
    %687 = vmatmul.f32.gmra.mxu0 %v629
    %v688 = vpop.f32.mrf.mxu0
    %v689 = vadd.f32 %v100, %v688
    %690 = vdwg.mxu0
    %691 = vmatpush.msra.mxu0 %v90
    %692 = vmatpush.msra.mxu0 %v87
    %693 = vmatpush.msra.mxu0 %v84
    %694 = vmatpush.msra.mxu0 %v81
    %695 = vmatpush.msra.mxu0 %v78
    %696 = vmatpush.msra.mxu0 %v75
    %697 = vmatpush.msra.mxu0 %v72
    %698 = vmatpush.msra.mxu0 %v69
    %699 = vmatpush.msra.mxu0 %v66
    %700 = vmatpush.msra.mxu0 %v63
    %701 = vmatpush.msra.mxu0 %v60
    %702 = vmatpush.msra.mxu0 %v57
    %703 = vmatpush.msra.mxu0 %v54
    %704 = vmatpush.msra.mxu0 %v51
    %705 = vmatpush.msra.mxu0 %v48
    %706 = vmatpush.msra.mxu0 %v45
    %707 = vmatmul.f32.gmra.mxu0 %v625
    %v708 = vpop.f32.mrf.mxu0
    %v709 = vadd.f32 %v169, %v708
    %710 = vdwg.mxu0
    %711 = vmatpush.msra.mxu0 %v91
    %712 = vmatpush.msra.mxu0 %v88
    %713 = vmatpush.msra.mxu0 %v85
    %714 = vmatpush.msra.mxu0 %v82
    %715 = vmatpush.msra.mxu0 %v79
    %716 = vmatpush.msra.mxu0 %v76
    %717 = vmatpush.msra.mxu0 %v73
    %718 = vmatpush.msra.mxu0 %v70
    %719 = vmatpush.msra.mxu0 %v67
    %720 = vmatpush.msra.mxu0 %v64
    %721 = vmatpush.msra.mxu0 %v61
    %722 = vmatpush.msra.mxu0 %v58
    %723 = vmatpush.msra.mxu0 %v55
    %724 = vmatpush.msra.mxu0 %v52
    %725 = vmatpush.msra.mxu0 %v49
    %726 = vmatpush.msra.mxu0 %v46
    %727 = vmatmul.f32.gmra.mxu0 %v625
    %v728 = vpop.f32.mrf.mxu0
    %v729 = vadd.f32 %v170, %v728
    %730 = vdwg.mxu0
    %731 = vmatpush.msra.mxu0 %v92
    %732 = vmatpush.msra.mxu0 %v89
    %733 = vmatpush.msra.mxu0 %v86
    %734 = vmatpush.msra.mxu0 %v83
    %735 = vmatpush.msra.mxu0 %v80
    %736 = vmatpush.msra.mxu0 %v77
    %737 = vmatpush.msra.mxu0 %v74
    %738 = vmatpush.msra.mxu0 %v71
    %739 = vmatpush.msra.mxu0 %v68
    %740 = vmatpush.msra.mxu0 %v65
    %741 = vmatpush.msra.mxu0 %v62
    %742 = vmatpush.msra.mxu0 %v59
    %743 = vmatpush.msra.mxu0 %v56
    %744 = vmatpush.msra.mxu0 %v53
    %745 = vmatpush.msra.mxu0 %v50
    %746 = vmatpush.msra.mxu0 %v47
    %747 = vmatmul.f32.gmra.mxu0 %v625
    %v748 = vpop.f32.mrf.mxu0
    %v749 = vadd.f32 %v171, %v748
    %750 = vdwg.mxu0
    %v751 = vadd.f32 %v649, %v709
    %v752 = vxor.u32 %v751, 2147483648
    %v753 = vmul.f32 %v752, 1.442695
    %v754 = vpow.pop %v753
    %v755 = vadd.f32 %v754, 1.0
    %v756 = vrcp.pop %v755
    %v757 = vmul.f32 %v755, %v756
    %v758 = vsub.f32 1.0, %v757
    %v759 = vmul.f32 %v756, %v758
    %v760 = vadd.f32 %v756, %v759
    %vm761 = vweird.f32 %v755
    %vm762 = vweird.f32 %v756
    %vm763 = vmor %vm761, %vm762
    %v764 = vsel %vm763, %v756, %v760
    %v765 = vand.u32 2147483647, %v755
    %vm766 = vcmp.eq.f32.partialorder %v765, 8.507059e+37
    %v767 = vand.u32 %v755, 2147483648
    %v768 = vor.u32 1.1754944e-38, %v767
    %v769 = vsel %vm766, %v768, %v764
    %v770 = vmul.f32 1.0, %v769
    %v771 = vadd.f32 %v669, %v729
    %v772 = vxor.u32 %v771, 2147483648
    %v773 = vmul.f32 %v772, 1.442695
    %v774 = vpow.pop %v773
    %v775 = vadd.f32 %v774, 1.0
    %v776 = vrcp.pop %v775
    %v777 = vmul.f32 %v775, %v776
    %v778 = vsub.f32 1.0, %v777
    %v779 = vmul.f32 %v776, %v778
    %v780 = vadd.f32 %v776, %v779
    %vm781 = vweird.f32 %v775
    %vm782 = vweird.f32 %v776
    %vm783 = vmor %vm781, %vm782
    %v784 = vsel %vm783, %v776, %v780
    %v785 = vand.u32 2147483647, %v775
    %vm786 = vcmp.eq.f32.partialorder %v785, 8.507059e+37
    %v787 = vand.u32 %v775, 2147483648
    %v788 = vor.u32 1.1754944e-38, %v787
    %v789 = vsel %vm786, %v788, %v784
    %v790 = vmul.f32 1.0, %v789
    %v791 = vmul.f32 %v770, %v749
    %v792 = vadd.f32 %v689, %v791
    %v793 = vtanh.pop %v792
    %v794 = vsub.f32 1.0, %v790
    %v795 = vmul.f32 %v794, %v793
    %v796 = vmul.f32 %v790, %v625
    %v797 = vadd.f32 %v795, %v796
    %v798 = vld [vmem:[%s3] sm:$0xff]
    %v799 = vld [vmem:[%s3 + $0x8] sm:$0xff]
    %v800 = vld [vmem:[%s3 + $0x10] sm:$0xff]
    %v801 = vld [vmem:[%s3 + $0x18] sm:$0xff]
    %v802 = vld [vmem:[%s3 + $0x20] sm:$0xff]
    %v803 = vld [vmem:[%s3 + $0x28] sm:$0xff]
    %v804 = vld [vmem:[%s3 + $0x30] sm:$0xff]
    %v805 = vld [vmem:[%s3 + $0x38] sm:$0xff]
    %v806 = vld [vmem:[%s3 + $0x40] sm:$0xff]
    %v807 = vld [vmem:[%s3 + $0x48] sm:$0xff]
    %v808 = vld [vmem:[%s3 + $0x50] sm:$0xff]
    %v809 = vld [vmem:[%s3 + $0x58] sm:$0xff]
    %v810 = vld [vmem:[%s3 + $0x60] sm:$0xff]
    %v811 = vld [vmem:[%s3 + $0x68] sm:$0xff]
    %v812 = vld [vmem:[%s3 + $0x70] sm:$0xff]
    %v813 = vld [vmem:[%s3 + $0x78] sm:$0xff]
    %v814 = vld [vmem:[%s3 + $0x80] sm:$0x1]
    %v815 = vperm.slane %v814, 0
    %816 = vmatpush.msra.mxu0 %v813
    %817 = vmatpush.msra.mxu0 %v812
    %818 = vmatpush.msra.mxu0 %v811
    %819 = vmatpush.msra.mxu0 %v810
    %820 = vmatpush.msra.mxu0 %v809
    %821 = vmatpush.msra.mxu0 %v808
    %822 = vmatpush.msra.mxu0 %v807
    %823 = vmatpush.msra.mxu0 %v806
    %824 = vmatpush.msra.mxu0 %v805
    %825 = vmatpush.msra.mxu0 %v804
    %826 = vmatpush.msra.mxu0 %v803
    %827 = vmatpush.msra.mxu0 %v802
    %828 = vmatpush.msra.mxu0 %v801
    %829 = vmatpush.msra.mxu0 %v800
    %830 = vmatpush.msra.mxu0 %v799
    %831 = vmatpush.msra.mxu0 %v798
    %832 = vmatmul.f32.gmra.mxu0 %v797
    %v833 = vpop.f32.mrf.mxu0
    %v834 = vadd.f32 %v815, %v833
    %835 = vdwg.mxu0
    %v836 = vxor.u32 %v834, 2147483648
    %v837 = vmul.f32 %v836, 1.442695
    %v838 = vpow.pop %v837
    %v839 = vadd.f32 %v838, 1.0
    %v840 = vrcp.pop %v839
    %v841 = vmul.f32 %v839, %v840
    %v842 = vsub.f32 1.0, %v841
    %v843 = vmul.f32 %v840, %v842
    %v844 = vadd.f32 %v840, %v843
    %vm845 = vweird.f32 %v839
    %vm846 = vweird.f32 %v840
    %vm847 = vmor %vm845, %vm846
    %v848 = vsel %vm847, %v840, %v844
    %v849 = vand.u32 2147483647, %v839
    %vm850 = vcmp.eq.f32.partialorder %v849, 8.507059e+37
    %v851 = vand.u32 %v839, 2147483648
    %v852 = vor.u32 1.1754944e-38, %v851
    %v853 = vsel %vm850, %v852, %v848
    %v854 = vmul.f32 1.0, %v853
    %vm855 = vcmask 1024
    %856 = vst.msk [vmem:[%s4] sm:$0x3] %vm855, %v854
    // Predicated region
    $region22: #{tpu_custom_call.1} parent=1 // pred_check
      _
    $region23: #{tpu_custom_call.1} parent=1 // pred_check_branch
      %858 = sbr.rel (0) target = $region25
    $region24: #{tpu_custom_call.1} parent=1 // pred_region
      _
    $region25: #{tpu_custom_call.1} parent=1 // pred_fallthru
      _
    // Predicated region
    $region26: #{tpu_custom_call.1} parent=1 // pred_check
      _
    $region27: #{tpu_custom_call.1} parent=1 // pred_check_branch
      %860 = sbr.rel (0) target = $region29
    $region28: #{tpu_custom_call.1} parent=1 // pred_region
      _
    $region29: #{tpu_custom_call.1} parent=1 // pred_fallthru
      _
    %861 = vsyncpa [#allocation3], 1

</llo_original>
